<compile_context>
chip_gen: v5e
topology: v5e:2x2
jax: 0.10.0
libtpu: 0.0.40
codegen_flags: <defaults>
</compile_context>

<pallas_src>
import functools

import numpy as np
import jax
import jax.numpy as jnp
from jax.experimental import pallas as pl
from jax.experimental.pallas import tpu as pltpu

LN_EPS = 1e-5
VMEM_LIMIT = 32 * 1024 * 1024          # explicit scoped-VMEM limit (safe on v5e/v6e/v7x)
BIG_IDX = np.int32(2 ** 30)            # index sentinel for masked / padding entries


def _round_up(x, m):
    return ((x + m - 1) // m) * m


def _pad_rows(x, rows_pad):
    rows = x.shape[0]
    if rows_pad == rows:               # static check: no copy for aligned shapes
        return x
    return jnp.concatenate(
        [x, jnp.zeros((rows_pad - rows,) + x.shape[1:], x.dtype)], axis=0)


def _layernorm(h, gamma, beta, inv_h):
    # biased variance, eps = 1e-5 (nn.LayerNorm defaults); reductions via sum * const.
    mu = jnp.sum(h, axis=-1, keepdims=True) * inv_h
    d = h - mu
    var = jnp.sum(d * d, axis=-1, keepdims=True) * inv_h
    return d * jax.lax.rsqrt(var + LN_EPS) * gamma + beta


# ------------------- encoder: Linear -> LN -> ReLU -> Linear -> LN -------------------
def encoder_kernel(x_ref, w1_ref, b1_ref, g1_ref, be1_ref,
                   w2_ref, b2_ref, g2_ref, be2_ref, o_ref, *, inv_h, transpose_out):
    # Dropout layers are identity in eval mode.
    h = jnp.dot(x_ref[...], w1_ref[...], preferred_element_type=jnp.float32) + b1_ref[...]
    h = _layernorm(h, g1_ref[...], be1_ref[...], inv_h)
    h = jnp.maximum(h, 0.0)
    h = jnp.dot(h, w2_ref[...], preferred_element_type=jnp.float32) + b2_ref[...]
    h = _layernorm(h, g2_ref[...], be2_ref[...], inv_h)
    o_ref[...] = h.T if transpose_out else h


def encode_rows(x, params, *, tile, transpose_out=False):
    """Encode a [rows, D_in] matrix, row-tiled; weights stay VMEM-resident.

    With transpose_out=True the output is written as [hidden, rows] (one transpose per
    encoder tile) so the downstream scores matmul needs no per-tile transpose."""
    rows, d_in = x.shape
    hidden = params["w1"].shape[1]
    assert rows % tile == 0

    row_spec = lambda i: (i, 0)
    full_spec = lambda i: (0, 0)
    if transpose_out:
        out_shape = jax.ShapeDtypeStruct((hidden, rows), jnp.float32)
        out_spec = pl.BlockSpec((hidden, tile), lambda i: (0, i))
    else:
        out_shape = jax.ShapeDtypeStruct((rows, hidden), jnp.float32)
        out_spec = pl.BlockSpec((tile, hidden), row_spec)

    return pl.pallas_call(
        functools.partial(encoder_kernel, inv_h=1.0 / hidden, transpose_out=transpose_out),
        out_shape=out_shape,
        grid=(rows // tile,),
        in_specs=[
            pl.BlockSpec((tile, d_in), row_spec),
            pl.BlockSpec((d_in, hidden), full_spec),
            pl.BlockSpec((1, hidden), full_spec),
            pl.BlockSpec((1, hidden), full_spec),
            pl.BlockSpec((1, hidden), full_spec),
            pl.BlockSpec((hidden, hidden), full_spec),
            pl.BlockSpec((1, hidden), full_spec),
            pl.BlockSpec((1, hidden), full_spec),
            pl.BlockSpec((1, hidden), full_spec),
        ],
        out_specs=out_spec,
        compiler_params=pltpu.CompilerParams(
            dimension_semantics=("parallel",),
            vmem_limit_bytes=VMEM_LIMIT),
    )(x, params["w1"], params["b1"], params["g1"], params["be1"],
      params["w2"], params["b2"], params["g2"], params["be2"])


# --------------- fused scores + sigmoid + running top-k over item tiles ---------------
def scores_topk_kernel(u_ref, itT_ref, probs_ref, vals_ref, idx_ref,
                       *, k, min_idx, n_items):
    j = pl.program_id(1)

    @pl.when(j == 0)
    def _init():
        vals_ref[...] = jnp.full(vals_ref.shape, -jnp.inf, vals_ref.dtype)
        idx_ref[...] = jnp.full(idx_ref.shape, BIG_IDX, idx_ref.dtype)

    # Plain [tm,H] x [H,tn] matmul (item encodings are pre-transposed).
    s = jnp.dot(u_ref[...], itT_ref[...], preferred_element_type=jnp.float32)
    probs_ref[...] = jax.nn.sigmoid(s)

    tm, tn = s.shape
    col0 = jax.lax.broadcasted_iota(jnp.int32, (tm, tn), 1) + j * tn
    valid = col0 < n_items                            # mask padded item columns
    cv = jnp.where(valid, s, -jnp.inf)
    ci = jnp.where(valid, col0 + min_idx, BIG_IDX)    # min_idx folded in; no epilogue

    # (1) local top-k of this tile: k extract-max passes over width tn.
    #     Tie-break = smallest global index (matches first-occurrence semantics).
    loc_v, loc_i = [], []
    for _ in range(k):
        m = jnp.max(cv, axis=1, keepdims=True)
        sel = jnp.min(jnp.where(cv == m, ci, BIG_IDX), axis=1, keepdims=True)
        loc_v.append(m)
        loc_i.append(sel)
        cv = jnp.where(ci == sel, -jnp.inf, cv)

    # (2) merge two k-wide lists (running slab's first k lanes + local top-k):
    #     k passes over width 2k only. Running entries come from earlier (smaller-index)
    #     tiles, so min-index tie-break preserves global first-index order.
    run_v = vals_ref[...]
    run_i = idx_ref[...]
    mv = jnp.concatenate([run_v[:, :k]] + loc_v, axis=1)
    mi = jnp.concatenate([run_i[:, :k]] + loc_i, axis=1)
    new_v, new_i = [], []
    for _ in range(k):
        m = jnp.max(mv, axis=1, keepdims=True)
        sel = jnp.min(jnp.where(mv == m, mi, BIG_IDX), axis=1, keepdims=True)
        new_v.append(m)
        new_i.append(sel)
        mv = jnp.where(mi == sel, -jnp.inf, mv)

    kpad = vals_ref.shape[1]
    pad_w = kpad - k
    if pad_w:
        new_v.append(jnp.full((tm, pad_w), -jnp.inf, jnp.float32))
        new_i.append(jnp.full((tm, pad_w), BIG_IDX, jnp.int32))
    vals_ref[...] = jnp.concatenate(new_v, axis=1)
    idx_ref[...] = jnp.concatenate(new_i, axis=1)


def fused_scores_topk(user_enc, item_enc_T, *, k, min_idx, n_items, tm_u, tn_i):
    n_u_pad, hidden = user_enc.shape
    n_i_pad = item_enc_T.shape[1]
    kpad = max(128, _round_up(k, 128))          # lane-dense top-k output slab
    probs, vals, idx = pl.pallas_call(
        functools.partial(scores_topk_kernel, k=k, min_idx=min_idx, n_items=n_items),
        out_shape=(
            jax.ShapeDtypeStruct((n_u_pad, n_i_pad), jnp.float32),
            jax.ShapeDtypeStruct((n_u_pad, kpad), jnp.float32),
            jax.ShapeDtypeStruct((n_u_pad, kpad), jnp.int32),
        ),
        grid=(n_u_pad // tm_u, n_i_pad // tn_i),
        in_specs=[
            pl.BlockSpec((tm_u, hidden), lambda i, j: (i, 0)),
            pl.BlockSpec((hidden, tn_i), lambda i, j: (0, j)),
        ],
        out_specs=(
            pl.BlockSpec((tm_u, tn_i), lambda i, j: (i, j)),
            pl.BlockSpec((tm_u, kpad), lambda i, j: (i, 0)),   # resident accumulator
            pl.BlockSpec((tm_u, kpad), lambda i, j: (i, 0)),   # resident accumulator
        ),
        compiler_params=pltpu.CompilerParams(
            dimension_semantics=("parallel", "arbitrary"),
            vmem_limit_bytes=VMEM_LIMIT),
    )(user_enc, item_enc_T)
    return probs, vals, idx


# ---------------------------------- module wrapper ----------------------------------
class TopKWrapper:
    def __init__(self, indices, values, probabilities):
        self.indices = indices
        self.values = values
        self.probabilities = probabilities


def decision_maker_forward(params, user_embeddings, item_embeddings, *, k, min_idx):
    item_embeddings = item_embeddings[min_idx:]
    n_u, d_in = user_embeddings.shape
    n_i = item_embeddings.shape[0]
    assert k <= n_i, "k must not exceed number of items (torch.topk would raise)"

    # ---- tiling ----
    # User rows: tile <= 256 (multiple of 8), and >=2 row tiles whenever possible so
    # both v7x TensorCores get work on the "parallel" axis of the scores kernel.
    n_u_pad = _round_up(n_u, 8)
    tm_u = min(256, n_u_pad)
    if n_u_pad // tm_u < 2 and tm_u > 8:
        tm_u = _round_up((n_u_pad + 1) // 2, 8)
    n_u_pad = _round_up(n_u_pad, tm_u)

    # Item columns: lane-dense 128-multiples; tile <= 1024 and dividing the padded
    # count (unmasked probs stores; per-step VMEM stays well under v7x's 64 MiB).
    n_i_pad = _round_up(n_i, 128)
    tn_i = min(1024, n_i_pad)
    while n_i_pad % tn_i:
        tn_i -= 128

    # Encoder row tiles: grow up to 1024 while divisibility allows (encoder is
    # HBM-bound; bigger tiles amortize per-grid-step overhead).
    tm_enc_u = tm_u
    while tm_enc_u * 2 <= min(1024, n_u_pad) and n_u_pad % (tm_enc_u * 2) == 0:
        tm_enc_u *= 2
    tn_enc_i = tn_i
    while tn_enc_i * 2 <= min(1024, n_i_pad) and n_i_pad % (tn_enc_i * 2) == 0:
        tn_enc_i *= 2

    # Two encoder launches writing directly to their outputs (no concat/split HBM
    # round-trips); pad inputs only when not already tile-aligned.
    user_enc = encode_rows(
        _pad_rows(user_embeddings.astype(jnp.float32), n_u_pad), params, tile=tm_enc_u)
    # Item encodings emitted pre-transposed [H, n_i_pad]: scores kernel does a plain
    # [tm,H] x [H,tn] matmul with no per-(user-tile x item-tile) transpose.
    item_enc_T = encode_rows(
        _pad_rows(item_embeddings.astype(jnp.float32), n_i_pad), params,
        tile=tn_enc_i, transpose_out=True)

    probs, vals, idx = fused_scores_topk(
        user_enc, item_enc_T, k=k, min_idx=min_idx, n_items=n_i,
        tm_u=tm_u, tn_i=tn_i)

    # Slice only when the launch actually padded — avoids re-reading probs (the
    # largest array) for already-aligned shapes.
    if n_u_pad != n_u:
        probs = probs[:n_u]
        vals = vals[:n_u]
        idx = idx[:n_u]
    if n_i_pad != n_i:
        probs = probs[:, :n_i]

    # TODO(synk): filter_history() needs a populated `graph` (node_to_neighbors),
    # which is None at __init__; this forward path corresponds to use_filter=False.

    topk = TopKWrapper(idx[:, :k], vals[:, :k], probs)
    user_loss = jnp.zeros((n_u,), jnp.float32)     # encode_nodes returns zeros(rows)
    item_loss = jnp.zeros((n_i,), jnp.float32)
    add_loss = jnp.float32(0.0)                    # torch.FloatTensor([0]).mean()
    return topk, user_loss, item_loss, add_loss


def init_params(key, input_size, hidden_size):
    k1, k2 = jax.random.split(key)
    return {
        "w1": jax.random.normal(k1, (input_size, hidden_size), jnp.float32) * 0.1,
        "b1": jnp.zeros((1, hidden_size), jnp.float32),
        "g1": jnp.ones((1, hidden_size), jnp.float32),
        "be1": jnp.zeros((1, hidden_size), jnp.float32),
        "w2": jax.random.normal(k2, (hidden_size, hidden_size), jnp.float32) * 0.1,
        "b2": jnp.zeros((1, hidden_size), jnp.float32),
        "g2": jnp.ones((1, hidden_size), jnp.float32),
        "be2": jnp.zeros((1, hidden_size), jnp.float32),
    }


if __name__ == "__main__":
    key = jax.random.PRNGKey(0)
    k_top, min_idx, num_items = 4, 2, 16
    input_size, hidden_size = 128, 128     # lane-dense feature dims (multiple of 128)
    num_users = 8

    kp, ku, ki = jax.random.split(key, 3)
    params = init_params(kp, input_size, hidden_size)
    user_embeddings = jax.random.normal(ku, (num_users, input_size), jnp.float32)
    item_embeddings = jax.random.normal(ki, (num_items + min_idx, input_size), jnp.float32)

    topk, user_loss, item_loss, add_loss = decision_maker_forward(
        params, user_embeddings, item_embeddings, k=k_top, min_idx=min_idx)
    jax.block_until_ready((topk.indices, topk.values, topk.probabilities,
                           user_loss, item_loss, add_loss))

    # Pure-JAX reference (matches the PyTorch forward in eval mode).
    def ref_ln(h, g, b):
        mu = h.mean(-1, keepdims=True)
        var = ((h - mu) ** 2).mean(-1, keepdims=True)
        return (h - mu) / jnp.sqrt(var + LN_EPS) * g + b

    def ref_enc(x):
        h = ref_ln(x @ params["w1"] + params["b1"], params["g1"], params["be1"])
        h = jnp.maximum(h, 0.0)
        return ref_ln(h @ params["w2"] + params["b2"], params["g2"], params["be2"])

    ue = ref_enc(user_embeddings)
    ie = ref_enc(item_embeddings[min_idx:])
    ref_scores = ue @ ie.T
    ref_vals, ref_idx = jax.lax.top_k(ref_scores, k_top)

    assert topk.indices.shape == (num_users, k_top)
    assert topk.values.shape == (num_users, k_top)
    assert topk.probabilities.shape == (num_users, num_items)
    np.testing.assert_allclose(np.asarray(topk.probabilities),
                               np.asarray(jax.nn.sigmoid(ref_scores)),
                               rtol=2e-3, atol=2e-3)
    np.testing.assert_allclose(np.asarray(topk.values), np.asarray(ref_vals),
                               rtol=2e-3, atol=2e-3)
    assert np.array_equal(np.asarray(topk.indices), np.asarray(ref_idx) + min_idx)
    print("KERNEL_OK")
</pallas_src>

<mosaic_0001>
module attributes {stable_mosaic.version = 11 : i64} {
  func.func @encoder_kernel(%arg0: i32, %arg1: memref<8x128xf32, #tpu.memory_space<vmem>>, %arg2: memref<128x128xf32, #tpu.memory_space<vmem>>, %arg3: memref<1x128xf32, #tpu.memory_space<vmem>>, %arg4: memref<1x128xf32, #tpu.memory_space<vmem>>, %arg5: memref<1x128xf32, #tpu.memory_space<vmem>>, %arg6: memref<128x128xf32, #tpu.memory_space<vmem>>, %arg7: memref<1x128xf32, #tpu.memory_space<vmem>>, %arg8: memref<1x128xf32, #tpu.memory_space<vmem>>, %arg9: memref<1x128xf32, #tpu.memory_space<vmem>>, %arg10: memref<8x128xf32, #tpu.memory_space<vmem>>) attributes {dimension_semantics = [#tpu.dimension_semantics<parallel>], iteration_bounds = array<i64: 1>, scalar_prefetch = 0 : i64, scratch_operands = 0 : i64, tpu.core_type = #tpu.core_type<tc>, window_params = [{transform_indices = @transform_0, window_bounds = array<i64: 8, 128>}, {pipeline_mode = #tpu.pipeline_mode<synchronous>, transform_indices = @transform_1, window_bounds = array<i64: 128, 128>}, {pipeline_mode = #tpu.pipeline_mode<synchronous>, transform_indices = @transform_2, window_bounds = array<i64: 1, 128>}, {pipeline_mode = #tpu.pipeline_mode<synchronous>, transform_indices = @transform_3, window_bounds = array<i64: 1, 128>}, {pipeline_mode = #tpu.pipeline_mode<synchronous>, transform_indices = @transform_4, window_bounds = array<i64: 1, 128>}, {pipeline_mode = #tpu.pipeline_mode<synchronous>, transform_indices = @transform_5, window_bounds = array<i64: 128, 128>}, {pipeline_mode = #tpu.pipeline_mode<synchronous>, transform_indices = @transform_6, window_bounds = array<i64: 1, 128>}, {pipeline_mode = #tpu.pipeline_mode<synchronous>, transform_indices = @transform_7, window_bounds = array<i64: 1, 128>}, {pipeline_mode = #tpu.pipeline_mode<synchronous>, transform_indices = @transform_8, window_bounds = array<i64: 1, 128>}, {transform_indices = @transform_9, window_bounds = array<i64: 8, 128>}]} {
    %c0 = arith.constant 0 : index
    %c0_0 = arith.constant 0 : index
    %0 = vector.load %arg1[%c0, %c0_0] : memref<8x128xf32, #tpu.memory_space<vmem>>, vector<8x128xf32>
    %c0_1 = arith.constant 0 : index
    %c0_2 = arith.constant 0 : index
    %1 = vector.load %arg2[%c0_1, %c0_2] : memref<128x128xf32, #tpu.memory_space<vmem>>, vector<128x128xf32>
    %cst = arith.constant dense<0.000000e+00> : vector<8x128xf32>
    %2 = tpu.matmul %0, %1, %cst {dimension_numbers = #tpu.dot_dimension_numbers<[1], [0], [0], [1], [0, 0, 1, 1], [], []>} : vector<8x128xf32>, vector<128x128xf32>, vector<8x128xf32> -> vector<8x128xf32>
    %c0_3 = arith.constant 0 : index
    %c0_4 = arith.constant 0 : index
    %3 = vector.load %arg3[%c0_3, %c0_4] : memref<1x128xf32, #tpu.memory_space<vmem>>, vector<1x128xf32>
    %4 = vector.broadcast %3 : vector<1x128xf32> to vector<8x128xf32>
    %5 = arith.addf %2, %4 : vector<8x128xf32>
    %c0_5 = arith.constant 0 : index
    %c0_6 = arith.constant 0 : index
    %6 = vector.load %arg4[%c0_5, %c0_6] : memref<1x128xf32, #tpu.memory_space<vmem>>, vector<1x128xf32>
    %c0_7 = arith.constant 0 : index
    %c0_8 = arith.constant 0 : index
    %7 = vector.load %arg5[%c0_7, %c0_8] : memref<1x128xf32, #tpu.memory_space<vmem>>, vector<1x128xf32>
    %cst_9 = arith.constant dense<0.000000e+00> : vector<8xf32>
    %8 = vector.multi_reduction <add>, %5, %cst_9 [1] : vector<8x128xf32> to vector<8xf32>
    %9 = vector.shape_cast %8 : vector<8xf32> to vector<8x1xf32>
    %cst_10 = arith.constant 7.812500e-03 : f32
    %10 = vector.broadcast %cst_10 : f32 to vector<8x1xf32>
    %11 = arith.mulf %9, %10 : vector<8x1xf32>
    %12 = vector.broadcast %11 : vector<8x1xf32> to vector<8x128xf32>
    %13 = arith.subf %5, %12 : vector<8x128xf32>
    %14 = arith.mulf %13, %13 : vector<8x128xf32>
    %cst_11 = arith.constant dense<0.000000e+00> : vector<8xf32>
    %15 = vector.multi_reduction <add>, %14, %cst_11 [1] : vector<8x128xf32> to vector<8xf32>
    %16 = vector.shape_cast %15 : vector<8xf32> to vector<8x1xf32>
    %cst_12 = arith.constant 7.812500e-03 : f32
    %17 = vector.broadcast %cst_12 : f32 to vector<8x1xf32>
    %18 = arith.mulf %16, %17 : vector<8x1xf32>
    %cst_13 = arith.constant 9.99999974E-6 : f32
    %19 = vector.broadcast %cst_13 : f32 to vector<8x1xf32>
    %20 = arith.addf %18, %19 : vector<8x1xf32>
    %21 = math.rsqrt %20 : vector<8x1xf32>
    %22 = vector.broadcast %21 : vector<8x1xf32> to vector<8x128xf32>
    %23 = arith.mulf %13, %22 : vector<8x128xf32>
    %24 = vector.broadcast %6 : vector<1x128xf32> to vector<8x128xf32>
    %25 = arith.mulf %23, %24 : vector<8x128xf32>
    %26 = vector.broadcast %7 : vector<1x128xf32> to vector<8x128xf32>
    %27 = arith.addf %25, %26 : vector<8x128xf32>
    %cst_14 = arith.constant 0.000000e+00 : f32
    %28 = vector.broadcast %cst_14 : f32 to vector<8x128xf32>
    %29 = arith.maximumf %27, %28 : vector<8x128xf32>
    %c0_15 = arith.constant 0 : index
    %c0_16 = arith.constant 0 : index
    %30 = vector.load %arg6[%c0_15, %c0_16] : memref<128x128xf32, #tpu.memory_space<vmem>>, vector<128x128xf32>
    %cst_17 = arith.constant dense<0.000000e+00> : vector<8x128xf32>
    %31 = tpu.matmul %29, %30, %cst_17 {dimension_numbers = #tpu.dot_dimension_numbers<[1], [0], [0], [1], [0, 0, 1, 1], [], []>} : vector<8x128xf32>, vector<128x128xf32>, vector<8x128xf32> -> vector<8x128xf32>
    %c0_18 = arith.constant 0 : index
    %c0_19 = arith.constant 0 : index
    %32 = vector.load %arg7[%c0_18, %c0_19] : memref<1x128xf32, #tpu.memory_space<vmem>>, vector<1x128xf32>
    %33 = vector.broadcast %32 : vector<1x128xf32> to vector<8x128xf32>
    %34 = arith.addf %31, %33 : vector<8x128xf32>
    %c0_20 = arith.constant 0 : index
    %c0_21 = arith.constant 0 : index
    %35 = vector.load %arg8[%c0_20, %c0_21] : memref<1x128xf32, #tpu.memory_space<vmem>>, vector<1x128xf32>
    %c0_22 = arith.constant 0 : index
    %c0_23 = arith.constant 0 : index
    %36 = vector.load %arg9[%c0_22, %c0_23] : memref<1x128xf32, #tpu.memory_space<vmem>>, vector<1x128xf32>
    %cst_24 = arith.constant dense<0.000000e+00> : vector<8xf32>
    %37 = vector.multi_reduction <add>, %34, %cst_24 [1] : vector<8x128xf32> to vector<8xf32>
    %38 = vector.shape_cast %37 : vector<8xf32> to vector<8x1xf32>
    %cst_25 = arith.constant 7.812500e-03 : f32
    %39 = vector.broadcast %cst_25 : f32 to vector<8x1xf32>
    %40 = arith.mulf %38, %39 : vector<8x1xf32>
    %41 = vector.broadcast %40 : vector<8x1xf32> to vector<8x128xf32>
    %42 = arith.subf %34, %41 : vector<8x128xf32>
    %43 = arith.mulf %42, %42 : vector<8x128xf32>
    %cst_26 = arith.constant dense<0.000000e+00> : vector<8xf32>
    %44 = vector.multi_reduction <add>, %43, %cst_26 [1] : vector<8x128xf32> to vector<8xf32>
    %45 = vector.shape_cast %44 : vector<8xf32> to vector<8x1xf32>
    %cst_27 = arith.constant 7.812500e-03 : f32
    %46 = vector.broadcast %cst_27 : f32 to vector<8x1xf32>
    %47 = arith.mulf %45, %46 : vector<8x1xf32>
    %cst_28 = arith.constant 9.99999974E-6 : f32
    %48 = vector.broadcast %cst_28 : f32 to vector<8x1xf32>
    %49 = arith.addf %47, %48 : vector<8x1xf32>
    %50 = math.rsqrt %49 : vector<8x1xf32>
    %51 = vector.broadcast %50 : vector<8x1xf32> to vector<8x128xf32>
    %52 = arith.mulf %42, %51 : vector<8x128xf32>
    %53 = vector.broadcast %35 : vector<1x128xf32> to vector<8x128xf32>
    %54 = arith.mulf %52, %53 : vector<8x128xf32>
    %55 = vector.broadcast %36 : vector<1x128xf32> to vector<8x128xf32>
    %56 = arith.addf %54, %55 : vector<8x128xf32>
    %c0_29 = arith.constant 0 : index
    %c0_30 = arith.constant 0 : index
    %57 = vector.load %arg10[%c0_29, %c0_30] : memref<8x128xf32, #tpu.memory_space<vmem>>, vector<8x128xf32>
    tpu.vector_store %arg10[%c0_29, %c0_30], %56 {strides = array<i32>} : memref<8x128xf32, #tpu.memory_space<vmem>>, vector<8x128xf32>,
    return
  }
  func.func @transform_0(%arg0: i32) -> (i32, i32) {
    %c0_i32 = arith.constant 0 : i32
    %c0_i32_0 = arith.constant 0 : i32
    return %arg0, %c0_i32 : i32, i32
  }
  func.func @transform_1(%arg0: i32) -> (i32, i32) {
    %c0_i32 = arith.constant 0 : i32
    %c0_i32_0 = arith.constant 0 : i32
    %c0_i32_1 = arith.constant 0 : i32
    return %c0_i32, %c0_i32_0 : i32, i32
  }
  func.func @transform_2(%arg0: i32) -> (i32, i32) {
    %c0_i32 = arith.constant 0 : i32
    %c0_i32_0 = arith.constant 0 : i32
    %c0_i32_1 = arith.constant 0 : i32
    return %c0_i32, %c0_i32_0 : i32, i32
  }
  func.func @transform_3(%arg0: i32) -> (i32, i32) {
    %c0_i32 = arith.constant 0 : i32
    %c0_i32_0 = arith.constant 0 : i32
    %c0_i32_1 = arith.constant 0 : i32
    return %c0_i32, %c0_i32_0 : i32, i32
  }
  func.func @transform_4(%arg0: i32) -> (i32, i32) {
    %c0_i32 = arith.constant 0 : i32
    %c0_i32_0 = arith.constant 0 : i32
    %c0_i32_1 = arith.constant 0 : i32
    return %c0_i32, %c0_i32_0 : i32, i32
  }
  func.func @transform_5(%arg0: i32) -> (i32, i32) {
    %c0_i32 = arith.constant 0 : i32
    %c0_i32_0 = arith.constant 0 : i32
    %c0_i32_1 = arith.constant 0 : i32
    return %c0_i32, %c0_i32_0 : i32, i32
  }
  func.func @transform_6(%arg0: i32) -> (i32, i32) {
    %c0_i32 = arith.constant 0 : i32
    %c0_i32_0 = arith.constant 0 : i32
    %c0_i32_1 = arith.constant 0 : i32
    return %c0_i32, %c0_i32_0 : i32, i32
  }
  func.func @transform_7(%arg0: i32) -> (i32, i32) {
    %c0_i32 = arith.constant 0 : i32
    %c0_i32_0 = arith.constant 0 : i32
    %c0_i32_1 = arith.constant 0 : i32
    return %c0_i32, %c0_i32_0 : i32, i32
  }
  func.func @transform_8(%arg0: i32) -> (i32, i32) {
    %c0_i32 = arith.constant 0 : i32
    %c0_i32_0 = arith.constant 0 : i32
    %c0_i32_1 = arith.constant 0 : i32
    return %c0_i32, %c0_i32_0 : i32, i32
  }
  func.func @transform_9(%arg0: i32) -> (i32, i32) {
    %c0_i32 = arith.constant 0 : i32
    %c0_i32_0 = arith.constant 0 : i32
    return %arg0, %c0_i32 : i32, i32
  }
}

</mosaic_0001>

<llo_original>
// kernel: tpu_custom_call.1
$region0: #{tpu_custom_call.1}
  #allocation0 [shape = 'u32[]', space=smem, size = 0x4, offset = 0x4, fixed_abs, tag = 'smem constant byte address 0x4 - core index']
  #allocation1 [shape = 'u32[72,128]{1,0:T(1,128)}', space=vmem, size = 0x9000, scoped, tag = 'internal scratch']
  %s0 = inlined_call_operand.hbm [shape: f32[8,128], index: 0, kind: input, shape index: {}]
  %s1 = inlined_call_operand.hbm [shape: f32[128,128], index: 1, kind: input, shape index: {}]
  %s2 = inlined_call_operand.vmem [shape: f32[1,128], index: 2, kind: input, shape index: {}]
  %s3 = inlined_call_operand.vmem [shape: f32[1,128], index: 3, kind: input, shape index: {}]
  %s4 = inlined_call_operand.vmem [shape: f32[1,128], index: 4, kind: input, shape index: {}]
  %s5 = inlined_call_operand.hbm [shape: f32[128,128], index: 5, kind: input, shape index: {}]
  %s6 = inlined_call_operand.vmem [shape: f32[1,128], index: 6, kind: input, shape index: {}]
  %s7 = inlined_call_operand.vmem [shape: f32[1,128], index: 7, kind: input, shape index: {}]
  %s8 = inlined_call_operand.vmem [shape: f32[1,128], index: 8, kind: input, shape index: {}]
  %s9 = inlined_call_operand.hbm [shape: f32[8,128], index: 9, kind: output, shape index: {}]
  %s10 = sld [smem:[#allocation0]]
  $region58: #{tpu_custom_call.1} parent=0
    _
  %s12 = ssub.s32 1, %s10
  %s13 = scalar_select 0, %s12, %s10
  $region1: #{tpu_custom_call.1} parent=0
    #allocation2 [shape = 'u8[4096]{0}', space=vmem, size = 0x1000, scoped, tag = 'input window, operand 0, single buffered']
    #allocation3 [shape = 's32[1]{0}', space=sflag, size = 0x4, scoped, tag = 'scoped memory for tpu_custom_call.1']
    #allocation4 [shape = 's32[1]{0}', space=sflag, size = 0x4, scoped, tag = 'scoped memory for tpu_custom_call.1']
    #allocation5 [shape = 'u8[65536]{0}', space=vmem, size = 0x10000, scoped, tag = 'input window, operand 1, single buffered']
    #allocation6 [shape = 's32[1]{0}', space=sflag, size = 0x4, scoped, tag = 'scoped memory for tpu_custom_call.1']
    #allocation7 [shape = 'u8[65536]{0}', space=vmem, size = 0x10000, scoped, tag = 'input window, operand 5, single buffered']
    #allocation8 [shape = 'u8[4096]{0}', space=vmem, size = 0x1000, scoped, tag = 'output window, operand 0, single buffered']
    %14 = vsyncpa [#allocation3], 0
    %15 = vsyncpa [#allocation6], 0
    %16 = vsyncpa [#allocation4], 0
    // Predicated region
    $region2: #{tpu_custom_call.1} parent=1 // pred_check
      _
    $region3: #{tpu_custom_call.1} parent=1 // pred_check_branch
      %18 = sbr.rel (0) target = $region5
    $region4: #{tpu_custom_call.1} parent=1 // pred_region
      %20 = vsyncadd [#allocation3], 0
      %s22 = sshll.u32 %s0, 4
      %s23 = int_to_ptr.hbm [resolvable:$true] %s22
      %s24 = sshll.u32 [#allocation2], 4
      %s25 = int_to_ptr.vmem [resolvable:$true] %s24
      %27 = dma.hbm_to_vmem [thread:$0]  %s23, 128, %s25, [#allocation3]
    $region5: #{tpu_custom_call.1} parent=1 // pred_fallthru
      _
    // Predicated region
    $region6: #{tpu_custom_call.1} parent=1 // pred_check
      _
    $region7: #{tpu_custom_call.1} parent=1 // pred_check_branch
      %29 = sbr.rel (0) target = $region9
    $region8: #{tpu_custom_call.1} parent=1 // pred_region
      %31 = vsyncadd [#allocation6], 0
      %s32 = sshll.u32 %s1, 4
      %s33 = int_to_ptr.hbm [resolvable:$true] %s32
      %s34 = sshll.u32 [#allocation5], 4
      %s35 = int_to_ptr.vmem [resolvable:$true] %s34
      %40 = dma.hbm_to_vmem [thread:$0]  %s33, 2048, %s35, [#allocation6], 128, 128, 8
    $region9: #{tpu_custom_call.1} parent=1 // pred_fallthru
      _
    // Predicated region
    $region10: #{tpu_custom_call.1} parent=1 // pred_check
      _
    $region11: #{tpu_custom_call.1} parent=1 // pred_check_branch
      %42 = sbr.rel (0) target = $region13
    $region12: #{tpu_custom_call.1} parent=1 // pred_region
      _
    $region13: #{tpu_custom_call.1} parent=1 // pred_fallthru
      _
    // Predicated region
    $region14: #{tpu_custom_call.1} parent=1 // pred_check
      _
    $region15: #{tpu_custom_call.1} parent=1 // pred_check_branch
      %44 = sbr.rel (0) target = $region17
    $region16: #{tpu_custom_call.1} parent=1 // pred_region
      _
    $region17: #{tpu_custom_call.1} parent=1 // pred_fallthru
      _
    // Predicated region
    $region18: #{tpu_custom_call.1} parent=1 // pred_check
      _
    $region19: #{tpu_custom_call.1} parent=1 // pred_check_branch
      %46 = sbr.rel (0) target = $region21
    $region20: #{tpu_custom_call.1} parent=1 // pred_region
      _
    $region21: #{tpu_custom_call.1} parent=1 // pred_fallthru
      _
    // Predicated region
    $region22: #{tpu_custom_call.1} parent=1 // pred_check
      _
    $region23: #{tpu_custom_call.1} parent=1 // pred_check_branch
      %48 = sbr.rel (0) target = $region25
    $region24: #{tpu_custom_call.1} parent=1 // pred_region
      %50 = vsyncadd [#allocation6], 0
      %s51 = sshll.u32 %s5, 4
      %s52 = int_to_ptr.hbm [resolvable:$true] %s51
      %s53 = sshll.u32 [#allocation7], 4
      %s54 = int_to_ptr.vmem [resolvable:$true] %s53
      %59 = dma.hbm_to_vmem [thread:$0]  %s52, 2048, %s54, [#allocation6], 128, 128, 8
    $region25: #{tpu_custom_call.1} parent=1 // pred_fallthru
      _
    // Predicated region
    $region26: #{tpu_custom_call.1} parent=1 // pred_check
      _
    $region27: #{tpu_custom_call.1} parent=1 // pred_check_branch
      %61 = sbr.rel (0) target = $region29
    $region28: #{tpu_custom_call.1} parent=1 // pred_region
      _
    $region29: #{tpu_custom_call.1} parent=1 // pred_fallthru
      _
    // Predicated region
    $region30: #{tpu_custom_call.1} parent=1 // pred_check
      _
    $region31: #{tpu_custom_call.1} parent=1 // pred_check_branch
      %63 = sbr.rel (0) target = $region33
    $region32: #{tpu_custom_call.1} parent=1 // pred_region
      _
    $region33: #{tpu_custom_call.1} parent=1 // pred_fallthru
      _
    // Predicated region
    $region34: #{tpu_custom_call.1} parent=1 // pred_check
      _
    $region35: #{tpu_custom_call.1} parent=1 // pred_check_branch
      %65 = sbr.rel (0) target = $region37
    $region36: #{tpu_custom_call.1} parent=1 // pred_region
      _
    $region37: #{tpu_custom_call.1} parent=1 // pred_fallthru
      _
    // Predicated region
    $region38: #{tpu_custom_call.1} parent=1 // pred_check
      _
    $region39: #{tpu_custom_call.1} parent=1 // pred_check_branch
      %67 = sbr.rel (0) target = $region41
    $region40: #{tpu_custom_call.1} parent=1 // pred_region
      %69 = dma.done [#allocation3], 128
    $region41: #{tpu_custom_call.1} parent=1 // pred_fallthru
      _
    // Predicated region
    $region42: #{tpu_custom_call.1} parent=1 // pred_check
      _
    $region43: #{tpu_custom_call.1} parent=1 // pred_check_branch
      %71 = sbr.rel (0) target = $region45
    $region44: #{tpu_custom_call.1} parent=1 // pred_region
      %73 = dma.done [#allocation6], 2048
    $region45: #{tpu_custom_call.1} parent=1 // pred_fallthru
      _
    // Predicated region
    $region46: #{tpu_custom_call.1} parent=1 // pred_check
      _
    $region47: #{tpu_custom_call.1} parent=1 // pred_check_branch
      %75 = sbr.rel (0) target = $region49
    $region48: #{tpu_custom_call.1} parent=1 // pred_region
      %77 = dma.done [#allocation6], 2048
    $region49: #{tpu_custom_call.1} parent=1 // pred_fallthru
      _
    %v78 = vld [vmem:[#allocation2] sm:$0xff]
    %v79 = vld [vmem:[#allocation5] sm:$0xff]
    %v80 = vld [vmem:[#allocation5 + $0x8] sm:$0xff]
    %v81 = vld [vmem:[#allocation5 + $0x10] sm:$0xff]
    %v82 = vld [vmem:[#allocation5 + $0x18] sm:$0xff]
    %v83 = vld [vmem:[#allocation5 + $0x20] sm:$0xff]
    %v84 = vld [vmem:[#allocation5 + $0x28] sm:$0xff]
    %v85 = vld [vmem:[#allocation5 + $0x30] sm:$0xff]
    %v86 = vld [vmem:[#allocation5 + $0x38] sm:$0xff]
    %v87 = vld [vmem:[#allocation5 + $0x40] sm:$0xff]
    %v88 = vld [vmem:[#allocation5 + $0x48] sm:$0xff]
    %v89 = vld [vmem:[#allocation5 + $0x50] sm:$0xff]
    %v90 = vld [vmem:[#allocation5 + $0x58] sm:$0xff]
    %v91 = vld [vmem:[#allocation5 + $0x60] sm:$0xff]
    %v92 = vld [vmem:[#allocation5 + $0x68] sm:$0xff]
    %v93 = vld [vmem:[#allocation5 + $0x70] sm:$0xff]
    %v94 = vld [vmem:[#allocation5 + $0x78] sm:$0xff]
    %v95 = vld [vmem:[%s2] sm:$0x1]
    %v97 = vperm.slane %v95, 0
    %99 = vmatpush.msra.mxu0 %v94
    %100 = vmatpush.msra.mxu0 %v93
    %101 = vmatpush.msra.mxu0 %v92
    %102 = vmatpush.msra.mxu0 %v91
    %103 = vmatpush.msra.mxu0 %v90
    %104 = vmatpush.msra.mxu0 %v89
    %105 = vmatpush.msra.mxu0 %v88
    %106 = vmatpush.msra.mxu0 %v87
    %107 = vmatpush.msra.mxu0 %v86
    %108 = vmatpush.msra.mxu0 %v85
    %109 = vmatpush.msra.mxu0 %v84
    %110 = vmatpush.msra.mxu0 %v83
    %111 = vmatpush.msra.mxu0 %v82
    %112 = vmatpush.msra.mxu0 %v81
    %113 = vmatpush.msra.mxu0 %v80
    %114 = vmatpush.msra.mxu0 %v79
    %115 = vmatmul.f32.gmra.mxu0 %v78
    %v116 = vpop.f32.mrf.mxu0
    %v117 = vadd.f32 %v97, %v116
    %118 = vdwg.mxu0
    %v119 = vld [vmem:[%s3] sm:$0x1]
    %v120 = vld [vmem:[%s4] sm:$0x1]
    %121 = vadd.xlane.f32.xlu0 %v117
    %v122 = vpop.xlane.xlu0 %121
    %v123 = vmul.f32 %v122, 0.0078125
    %v124 = vsub.f32 %v117, %v123
    %v125 = vmul.f32 %v124, %v124
    %126 = vadd.xlane.f32.xlu0 %v125
    %v127 = vpop.xlane.xlu0 %126
    %v128 = vmul.f32 %v127, 0.0078125
    %v129 = vadd.f32 %v128, 1e-05
    %v130 = vrsqrt.pop %v129
    %v131 = vmul.f32 %v130, %v129
    %v132 = vmul.f32 %v131, %v130
    %v133 = vmul.f32 0.5, %v132
    %v134 = vsub.f32 1.5, %v133
    %v135 = vmul.f32 %v130, %v134
    %vm136 = vweird.f32 %v129
    %vm137 = vweird.f32 %v130
    %vm138 = vmor %vm136, %vm137
    %v139 = vsel %vm138, %v130, %v135
    %v140 = vmul.f32 %v124, %v139
    %v142 = vperm.slane %v119, 0
    %v144 = vmul.f32 %v140, %v142
    %v146 = vperm.slane %v120, 0
    %v148 = vadd.f32 %v144, %v146
    %v149 = vmax.f32 %v148, 0.0
    %v150 = vld [vmem:[#allocation7] sm:$0xff]
    %v151 = vld [vmem:[#allocation7 + $0x8] sm:$0xff]
    %v152 = vld [vmem:[#allocation7 + $0x10] sm:$0xff]
    %v153 = vld [vmem:[#allocation7 + $0x18] sm:$0xff]
    %v154 = vld [vmem:[#allocation7 + $0x20] sm:$0xff]
    %v155 = vld [vmem:[#allocation7 + $0x28] sm:$0xff]
    %v156 = vld [vmem:[#allocation7 + $0x30] sm:$0xff]
    %v157 = vld [vmem:[#allocation7 + $0x38] sm:$0xff]
    %v158 = vld [vmem:[#allocation7 + $0x40] sm:$0xff]
    %v159 = vld [vmem:[#allocation7 + $0x48] sm:$0xff]
    %v160 = vld [vmem:[#allocation7 + $0x50] sm:$0xff]
    %v161 = vld [vmem:[#allocation7 + $0x58] sm:$0xff]
    %v162 = vld [vmem:[#allocation7 + $0x60] sm:$0xff]
    %v163 = vld [vmem:[#allocation7 + $0x68] sm:$0xff]
    %v164 = vld [vmem:[#allocation7 + $0x70] sm:$0xff]
    %v165 = vld [vmem:[#allocation7 + $0x78] sm:$0xff]
    %v166 = vld [vmem:[%s6] sm:$0x1]
    %v168 = vperm.slane %v166, 0
    %170 = vmatpush.msra.mxu0 %v165
    %171 = vmatpush.msra.mxu0 %v164
    %172 = vmatpush.msra.mxu0 %v163
    %173 = vmatpush.msra.mxu0 %v162
    %174 = vmatpush.msra.mxu0 %v161
    %175 = vmatpush.msra.mxu0 %v160
    %176 = vmatpush.msra.mxu0 %v159
    %177 = vmatpush.msra.mxu0 %v158
    %178 = vmatpush.msra.mxu0 %v157
    %179 = vmatpush.msra.mxu0 %v156
    %180 = vmatpush.msra.mxu0 %v155
    %181 = vmatpush.msra.mxu0 %v154
    %182 = vmatpush.msra.mxu0 %v153
    %183 = vmatpush.msra.mxu0 %v152
    %184 = vmatpush.msra.mxu0 %v151
    %185 = vmatpush.msra.mxu0 %v150
    %186 = vmatmul.f32.gmra.mxu0 %v149
    %v187 = vpop.f32.mrf.mxu0
    %v188 = vadd.f32 %v168, %v187
    %189 = vdwg.mxu0
    %v190 = vld [vmem:[%s7] sm:$0x1]
    %v191 = vld [vmem:[%s8] sm:$0x1]
    %192 = vadd.xlane.f32.xlu0 %v188
    %v193 = vpop.xlane.xlu0 %192
    %v194 = vmul.f32 %v193, 0.0078125
    %v195 = vsub.f32 %v188, %v194
    %v196 = vmul.f32 %v195, %v195
    %197 = vadd.xlane.f32.xlu0 %v196
    %v198 = vpop.xlane.xlu0 %197
    %v199 = vmul.f32 %v198, 0.0078125
    %v200 = vadd.f32 %v199, 1e-05
    %v201 = vrsqrt.pop %v200
    %v202 = vmul.f32 %v201, %v200
    %v203 = vmul.f32 %v202, %v201
    %v204 = vmul.f32 0.5, %v203
    %v205 = vsub.f32 1.5, %v204
    %v206 = vmul.f32 %v201, %v205
    %vm207 = vweird.f32 %v200
    %vm208 = vweird.f32 %v201
    %vm209 = vmor %vm207, %vm208
    %v210 = vsel %vm209, %v201, %v206
    %v211 = vmul.f32 %v195, %v210
    %v213 = vperm.slane %v190, 0
    %v215 = vmul.f32 %v211, %v213
    %v217 = vperm.slane %v191, 0
    %v219 = vadd.f32 %v215, %v217
    %220 = vst [vmem:[#allocation8] sm:$0xff] %v219
    // Predicated region
    $region50: #{tpu_custom_call.1} parent=1 // pred_check
      _
    $region51: #{tpu_custom_call.1} parent=1 // pred_check_branch
      %222 = sbr.rel (0) target = $region53
    $region52: #{tpu_custom_call.1} parent=1 // pred_region
      %224 = vsyncadd [#allocation4], 0
      %s226 = sshll.u32 [#allocation8], 4
      %s227 = int_to_ptr.vmem [resolvable:$true] %s226
      %s228 = sshll.u32 %s9, 4
      %s229 = int_to_ptr.hbm [resolvable:$true] %s228
      %231 = dma.vmem_to_hbm [thread:$0]  %s227, 128, %s229, [#allocation4]
    $region53: #{tpu_custom_call.1} parent=1 // pred_fallthru
      _
    // Predicated region
    $region54: #{tpu_custom_call.1} parent=1 // pred_check
      _
    $region55: #{tpu_custom_call.1} parent=1 // pred_check_branch
      %233 = sbr.rel (0) target = $region57
    $region56: #{tpu_custom_call.1} parent=1 // pred_region
      %235 = dma.done [#allocation4], 128
    $region57: #{tpu_custom_call.1} parent=1 // pred_fallthru
      _
    %236 = vsyncpa [#allocation3], 1
    %237 = vsyncpa [#allocation6], 1
    %238 = vsyncpa [#allocation4], 1

</llo_original>
